<compile_context>
chip_gen: v7x
topology: tpu7x:2x2x1
jax: 0.10.0
libtpu: 0.0.40
codegen_flags: <defaults>
</compile_context>

<pallas_src>
import functools

import jax
import jax.numpy as jnp
from jax.experimental import pallas as pl
from jax.experimental.pallas import tpu as pltpu

INPUT_SIZE = 32
OUTPUT_SIZE = 32
NUM_EXPERTS = 4
NUM_SELECTS = 2
BALANCE_LOSS_WEIGHT = 0.01
MAX_TILE_T = 512


# ----------------------------- fused Pallas kernel ------------------------------


def fused_moe_kernel(x_ref, wg1_ref, wg2_ref, we_ref,
                     y_ref, imp_ref, load_ref, *, num_valid, tile_t):
    """Per-tile: x (TILE_T, D_in), wg1 (D_in, E), wg2 (E, E), we (D_in, E*D_out)
       -> y (TILE_T, D_out), imp/load partials (1, 1, E)."""
    x = x_ref[...]                                                       # (TILE_T, D_in) f32

    # ---- gate network: logits = tanh(x @ Wg1) @ Wg2 (kept in f32) ----
    h = jnp.tanh(jnp.dot(x, wg1_ref[...], preferred_element_type=jnp.float32))
    logits = jnp.dot(h, wg2_ref[...], preferred_element_type=jnp.float32)  # (TILE_T, E)

    # ---- top-K selection via rank-by-comparison (ties -> lower expert index wins,
    #      matching lax.top_k / torch.topk deterministic ordering) ----
    col = jax.lax.broadcasted_iota(jnp.int32, logits.shape, 1)           # (TILE_T, E)
    rank = jnp.zeros(logits.shape, jnp.int32)
    for j in range(NUM_EXPERTS):                                         # static, unrolled
        lj = logits[:, j:j + 1]                                          # (TILE_T, 1)
        beats = (lj > logits) | ((lj == logits) & (j < col))
        rank = rank + beats.astype(jnp.int32)
    topk_mask = rank < NUM_SELECTS                                       # (TILE_T, E)

    # ---- masked softmax over the selected logits == scatter(softmax(topk_logits)) ----
    masked = jnp.where(topk_mask, logits, jnp.float32(-1e30))
    m = jnp.max(masked, axis=1, keepdims=True)
    p = jnp.where(topk_mask, jnp.exp(masked - m), jnp.float32(0.0))
    denom = jnp.sum(p, axis=1, keepdims=True)
    scores = p * pl.reciprocal(denom, approx=True)                       # (TILE_T, E), 0 off top-k

    # ---- per-tile balance-loss partials (padded rows masked out; cv^2 done in wrapper) ----
    row = jax.lax.broadcasted_iota(jnp.int32, (tile_t, 1), 0)
    valid = (pl.program_id(0) * tile_t + row) < num_valid                # (TILE_T, 1)
    scores_valid = jnp.where(valid, scores, jnp.float32(0.0))
    imp_ref[...] = jnp.sum(scores_valid, axis=0, keepdims=True).reshape(1, 1, NUM_EXPERTS)
    load_ref[...] = jnp.sum((scores_valid > 0).astype(jnp.float32), axis=0,
                            keepdims=True).reshape(1, 1, NUM_EXPERTS)

    # ---- expert combine: single lane-dense MXU matmul, then score-weighted reduce ----
    y_all = jnp.dot(x, we_ref[...], preferred_element_type=jnp.float32)  # (TILE_T, 128)
    y = scores[:, 0:1] * y_all[:, 0:OUTPUT_SIZE]
    for eidx in range(1, NUM_EXPERTS):                                   # static, unrolled
        y = y + scores[:, eidx:eidx + 1] * y_all[:, eidx * OUTPUT_SIZE:(eidx + 1) * OUTPUT_SIZE]
    y_ref[...] = y                                                       # padded rows: x==0 -> 0


# ----------------------------------- wrapper -----------------------------------


def prepare_params(raw_params):
    """One-time layout plumbing OUTSIDE the jitted forward: (E, D_in, D_out) -> (D_in, E*D_out)."""
    we_combined = jnp.transpose(raw_params["w_experts"], (1, 0, 2)).reshape(
        INPUT_SIZE, NUM_EXPERTS * OUTPUT_SIZE)
    return {
        "wg1": raw_params["wg1"],
        "wg2": raw_params["wg2"],
        "we_combined": we_combined,
    }


def base_moe_layer_forward(x, params):
    original_shape = x.shape[:-1]
    x_flat = x.reshape(-1, INPUT_SIZE).astype(jnp.float32)
    T = x_flat.shape[0]

    # token tile: multiple of 8 sublanes, capped so double-buffered tiles fit every generation
    tile_t = MAX_TILE_T if T >= MAX_TILE_T else max(8, ((T + 7) // 8) * 8)
    num_tiles = (T + tile_t - 1) // tile_t
    t_pad = num_tiles * tile_t
    if t_pad != T:
        x_flat = jnp.pad(x_flat, ((0, t_pad - T), (0, 0)))

    kernel = functools.partial(fused_moe_kernel, num_valid=T, tile_t=tile_t)

    y_pad, imp_part, load_part = pl.pallas_call(
        kernel,
        grid=(num_tiles,),
        out_shape=(
            jax.ShapeDtypeStruct((t_pad, OUTPUT_SIZE), jnp.float32),
            jax.ShapeDtypeStruct((num_tiles, 1, NUM_EXPERTS), jnp.float32),
            jax.ShapeDtypeStruct((num_tiles, 1, NUM_EXPERTS), jnp.float32),
        ),
        in_specs=[
            pl.BlockSpec((tile_t, INPUT_SIZE), lambda i: (i, 0)),                  # x tile
            pl.BlockSpec((INPUT_SIZE, NUM_EXPERTS), lambda i: (0, 0)),             # wg1 (resident)
            pl.BlockSpec((NUM_EXPERTS, NUM_EXPERTS), lambda i: (0, 0)),            # wg2 (resident)
            pl.BlockSpec((INPUT_SIZE, NUM_EXPERTS * OUTPUT_SIZE), lambda i: (0, 0)),  # expert slab
        ],
        out_specs=(
            pl.BlockSpec((tile_t, OUTPUT_SIZE), lambda i: (i, 0)),
            pl.BlockSpec((1, 1, NUM_EXPERTS), lambda i: (i, 0, 0)),
            pl.BlockSpec((1, 1, NUM_EXPERTS), lambda i: (i, 0, 0)),
        ),
        compiler_params=pltpu.CompilerParams(
            dimension_semantics=("parallel",),
        ),
    )(x_flat, params["wg1"], params["wg2"], params["we_combined"])

    y = y_pad[:T]
    importance = jnp.sum(imp_part, axis=(0, 1))                          # (E,)
    load = jnp.sum(load_part, axis=(0, 1))                               # (E,)

    def cv2(v):  # unbiased variance (ddof=1), matching torch.var default
        return jnp.var(v, ddof=1) / (jnp.mean(v) ** 2 + 1e-10)

    balance_loss = (cv2(importance) + cv2(load)) * BALANCE_LOSS_WEIGHT

    return {
        "hidden_states": y.reshape(original_shape + (OUTPUT_SIZE,)),
        "balance_loss": balance_loss,
    }


# --------------------------- pure-JAX reference (sanity check) ---------------------------


def reference_forward(x, raw_params):
    x_flat = x.reshape(-1, INPUT_SIZE)
    logits = jnp.tanh(x_flat @ raw_params["wg1"]) @ raw_params["wg2"]
    E = NUM_EXPERTS
    top_logits, top_indices = jax.lax.top_k(logits, min(NUM_SELECTS + 1, E))
    tk_logits = top_logits[:, :NUM_SELECTS]
    tk_idx = top_indices[:, :NUM_SELECTS]
    tk_scores = jax.nn.softmax(tk_logits.astype(jnp.float32), axis=1)
    one_hot = jax.nn.one_hot(tk_idx, E, dtype=tk_scores.dtype)
    scores_filtered = jnp.einsum("tk,tke->te", tk_scores, one_hot)

    importance = scores_filtered.sum(0)
    load = (scores_filtered > 0).sum(0).astype(jnp.float32)

    def cv2(v):
        v = v.astype(jnp.float32)
        return jnp.var(v, ddof=1) / (jnp.mean(v) ** 2 + 1e-10)

    balance_loss = (cv2(importance) + cv2(load)) * BALANCE_LOSS_WEIGHT

    expert_outs = jnp.einsum("td,edo->teo", x_flat, raw_params["w_experts"])
    y = jnp.einsum("te,teo->to", scores_filtered, expert_outs)
    return y.reshape(x.shape[:-1] + (OUTPUT_SIZE,)), balance_loss


# ----------------------------------- main -----------------------------------


if __name__ == "__main__":
    key = jax.random.PRNGKey(0)
    k_x, k_g1, k_g2, k_e = jax.random.split(key, 4)

    # small shapes consistent with BaseMoELayer.forward: (batch, seq, input_size)
    x = jax.random.normal(k_x, (2, 8, INPUT_SIZE), dtype=jnp.float32)

    raw_params = {
        # gate_network='mlp': Linear(D_in -> E, no bias) -> Tanh -> Linear(E -> E, no bias)
        # (stored pre-transposed so kernels compute x @ W)
        "wg1": 0.1 * jax.random.normal(k_g1, (INPUT_SIZE, NUM_EXPERTS), jnp.float32),
        "wg2": 0.1 * jax.random.normal(k_g2, (NUM_EXPERTS, NUM_EXPERTS), jnp.float32),
        # per-expert bias-free Linear(D_in -> D_out), stacked: (E, D_in, D_out)
        "w_experts": 0.05
        * jax.random.normal(k_e, (NUM_EXPERTS, INPUT_SIZE, OUTPUT_SIZE), jnp.float32),
    }
    params = prepare_params(raw_params)          # one-time lane-dense expert slab, outside jit

    fwd = jax.jit(base_moe_layer_forward)
    out = fwd(x, params)
    y = jax.block_until_ready(out["hidden_states"])
    bl = jax.block_until_ready(out["balance_loss"])

    # sanity check against a pure-JAX dense reference
    y_ref, bl_ref = reference_forward(x, raw_params)
    assert y.shape == (2, 8, OUTPUT_SIZE)
    assert jnp.allclose(y, y_ref, rtol=1e-2, atol=1e-2), "hidden_states mismatch vs reference"
    assert jnp.isfinite(bl)
    assert jnp.allclose(bl, bl_ref, rtol=1e-2, atol=1e-3), "balance_loss mismatch vs reference"

    print("KERNEL_OK")
</pallas_src>

<mosaic_0001>
module attributes {stable_mosaic.version = 11 : i64} {
  func.func @fused_moe_kernel(%arg0: i32, %arg1: memref<16x32xf32, #tpu.memory_space<vmem>>, %arg2: memref<32x4xf32, #tpu.memory_space<vmem>>, %arg3: memref<4x4xf32, #tpu.memory_space<vmem>>, %arg4: memref<32x128xf32, #tpu.memory_space<vmem>>, %arg5: memref<16x32xf32, #tpu.memory_space<vmem>>, %arg6: memref<1x1x4xf32, #tpu.memory_space<vmem>>, %arg7: memref<1x1x4xf32, #tpu.memory_space<vmem>>) attributes {dimension_semantics = [#tpu.dimension_semantics<parallel>], iteration_bounds = array<i64: 1>, scalar_prefetch = 0 : i64, scratch_operands = 0 : i64, tpu.core_type = #tpu.core_type<tc>, window_params = [{transform_indices = @transform_0, window_bounds = array<i64: 16, 32>}, {pipeline_mode = #tpu.pipeline_mode<synchronous>, transform_indices = @transform_1, window_bounds = array<i64: 32, 4>}, {pipeline_mode = #tpu.pipeline_mode<synchronous>, transform_indices = @transform_2, window_bounds = array<i64: 4, 4>}, {pipeline_mode = #tpu.pipeline_mode<synchronous>, transform_indices = @transform_3, window_bounds = array<i64: 32, 128>}, {transform_indices = @transform_4, window_bounds = array<i64: 16, 32>}, {transform_indices = @transform_5, window_bounds = array<i64: 1, 1, 4>}, {transform_indices = @transform_6, window_bounds = array<i64: 1, 1, 4>}]} {
    %c0 = arith.constant 0 : index
    %c0_0 = arith.constant 0 : index
    %0 = vector.load %arg1[%c0, %c0_0] : memref<16x32xf32, #tpu.memory_space<vmem>>, vector<16x32xf32>
    %c0_1 = arith.constant 0 : index
    %c0_2 = arith.constant 0 : index
    %1 = vector.load %arg2[%c0_1, %c0_2] : memref<32x4xf32, #tpu.memory_space<vmem>>, vector<32x4xf32>
    %cst = arith.constant dense<0.000000e+00> : vector<16x4xf32>
    %2 = tpu.matmul %0, %1, %cst {dimension_numbers = #tpu.dot_dimension_numbers<[1], [0], [0], [1], [0, 0, 1, 1], [], []>} : vector<16x32xf32>, vector<32x4xf32>, vector<16x4xf32> -> vector<16x4xf32>
    %3 = math.tanh %2 : vector<16x4xf32>
    %c0_3 = arith.constant 0 : index
    %c0_4 = arith.constant 0 : index
    %4 = vector.load %arg3[%c0_3, %c0_4] : memref<4x4xf32, #tpu.memory_space<vmem>>, vector<4x4xf32>
    %cst_5 = arith.constant dense<0.000000e+00> : vector<16x4xf32>
    %5 = tpu.matmul %3, %4, %cst_5 {dimension_numbers = #tpu.dot_dimension_numbers<[1], [0], [0], [1], [0, 0, 1, 1], [], []>} : vector<16x4xf32>, vector<4x4xf32>, vector<16x4xf32> -> vector<16x4xf32>
    %6 = tpu.iota {dimensions = array<i32: 1>} : vector<16x4xi32>
    %c0_i32 = arith.constant 0 : i32
    %7 = vector.broadcast %c0_i32 : i32 to vector<16x4xi32>
    %8 = vector.extract_strided_slice %5 {offsets = [0, 0], sizes = [16, 1], strides = [1, 1]} : vector<16x4xf32> to vector<16x1xf32>
    %9 = vector.broadcast %8 : vector<16x1xf32> to vector<16x4xf32>
    %10 = arith.cmpf ogt, %9, %5 : vector<16x4xf32>
    %11 = vector.broadcast %8 : vector<16x1xf32> to vector<16x4xf32>
    %12 = arith.cmpf oeq, %11, %5 : vector<16x4xf32>
    %c0_i32_6 = arith.constant 0 : i32
    %13 = vector.broadcast %c0_i32_6 : i32 to vector<16x4xi32>
    %14 = arith.cmpi sgt, %6, %13 : vector<16x4xi32>
    %15 = arith.andi %12, %14 : vector<16x4xi1>
    %16 = arith.ori %10, %15 : vector<16x4xi1>
    %17 = arith.extui %16 : vector<16x4xi1> to vector<16x4xi32>
    %18 = arith.addi %7, %17 : vector<16x4xi32>
    %19 = vector.extract_strided_slice %5 {offsets = [0, 1], sizes = [16, 1], strides = [1, 1]} : vector<16x4xf32> to vector<16x1xf32>
    %20 = vector.broadcast %19 : vector<16x1xf32> to vector<16x4xf32>
    %21 = arith.cmpf ogt, %20, %5 : vector<16x4xf32>
    %22 = vector.broadcast %19 : vector<16x1xf32> to vector<16x4xf32>
    %23 = arith.cmpf oeq, %22, %5 : vector<16x4xf32>
    %c1_i32 = arith.constant 1 : i32
    %24 = vector.broadcast %c1_i32 : i32 to vector<16x4xi32>
    %25 = arith.cmpi sgt, %6, %24 : vector<16x4xi32>
    %26 = arith.andi %23, %25 : vector<16x4xi1>
    %27 = arith.ori %21, %26 : vector<16x4xi1>
    %28 = arith.extui %27 : vector<16x4xi1> to vector<16x4xi32>
    %29 = arith.addi %18, %28 : vector<16x4xi32>
    %30 = vector.extract_strided_slice %5 {offsets = [0, 2], sizes = [16, 1], strides = [1, 1]} : vector<16x4xf32> to vector<16x1xf32>
    %31 = vector.broadcast %30 : vector<16x1xf32> to vector<16x4xf32>
    %32 = arith.cmpf ogt, %31, %5 : vector<16x4xf32>
    %33 = vector.broadcast %30 : vector<16x1xf32> to vector<16x4xf32>
    %34 = arith.cmpf oeq, %33, %5 : vector<16x4xf32>
    %c2_i32 = arith.constant 2 : i32
    %35 = vector.broadcast %c2_i32 : i32 to vector<16x4xi32>
    %36 = arith.cmpi sgt, %6, %35 : vector<16x4xi32>
    %37 = arith.andi %34, %36 : vector<16x4xi1>
    %38 = arith.ori %32, %37 : vector<16x4xi1>
    %39 = arith.extui %38 : vector<16x4xi1> to vector<16x4xi32>
    %40 = arith.addi %29, %39 : vector<16x4xi32>
    %41 = vector.extract_strided_slice %5 {offsets = [0, 3], sizes = [16, 1], strides = [1, 1]} : vector<16x4xf32> to vector<16x1xf32>
    %42 = vector.broadcast %41 : vector<16x1xf32> to vector<16x4xf32>
    %43 = arith.cmpf ogt, %42, %5 : vector<16x4xf32>
    %44 = vector.broadcast %41 : vector<16x1xf32> to vector<16x4xf32>
    %45 = arith.cmpf oeq, %44, %5 : vector<16x4xf32>
    %c3_i32 = arith.constant 3 : i32
    %46 = vector.broadcast %c3_i32 : i32 to vector<16x4xi32>
    %47 = arith.cmpi sgt, %6, %46 : vector<16x4xi32>
    %48 = arith.andi %45, %47 : vector<16x4xi1>
    %49 = arith.ori %43, %48 : vector<16x4xi1>
    %50 = arith.extui %49 : vector<16x4xi1> to vector<16x4xi32>
    %51 = arith.addi %40, %50 : vector<16x4xi32>
    %c2_i32_7 = arith.constant 2 : i32
    %52 = vector.broadcast %c2_i32_7 : i32 to vector<16x4xi32>
    %53 = arith.cmpi slt, %51, %52 : vector<16x4xi32>
    %cst_8 = arith.constant -1.000000e+30 : f32
    %54 = vector.broadcast %cst_8 : f32 to vector<16x4xf32>
    %55 = arith.select %53, %5, %54 : vector<16x4xi1>, vector<16x4xf32>
    %cst_9 = arith.constant dense<0xFF800000> : vector<16xf32>
    %56 = vector.multi_reduction <maximumf>, %55, %cst_9 [1] : vector<16x4xf32> to vector<16xf32>
    %57 = vector.shape_cast %56 : vector<16xf32> to vector<16x1xf32>
    %58 = vector.broadcast %57 : vector<16x1xf32> to vector<16x4xf32>
    %59 = arith.subf %55, %58 : vector<16x4xf32>
    %60 = math.exp %59 : vector<16x4xf32>
    %cst_10 = arith.constant 0.000000e+00 : f32
    %61 = vector.broadcast %cst_10 : f32 to vector<16x4xf32>
    %62 = arith.select %53, %60, %61 : vector<16x4xi1>, vector<16x4xf32>
    %cst_11 = arith.constant dense<0.000000e+00> : vector<16xf32>
    %63 = vector.multi_reduction <add>, %62, %cst_11 [1] : vector<16x4xf32> to vector<16xf32>
    %64 = vector.shape_cast %63 : vector<16xf32> to vector<16x1xf32>
    %65 = tpu.reciprocal %64 {approx = true} : vector<16x1xf32> -> vector<16x1xf32>
    %66 = vector.broadcast %65 : vector<16x1xf32> to vector<16x4xf32>
    %67 = arith.mulf %62, %66 : vector<16x4xf32>
    %68 = tpu.iota {dimensions = array<i32: 0>} : vector<16x1xi32>
    %c16_i32 = arith.constant 16 : i32
    %69 = arith.muli %arg0, %c16_i32 : i32
    %70 = vector.broadcast %69 : i32 to vector<16x1xi32>
    %71 = arith.addi %70, %68 : vector<16x1xi32>
    %c16_i32_12 = arith.constant 16 : i32
    %72 = vector.broadcast %c16_i32_12 : i32 to vector<16x1xi32>
    %73 = arith.cmpi slt, %71, %72 : vector<16x1xi32>
    %cst_13 = arith.constant 0.000000e+00 : f32
    %74 = vector.shape_cast %73 : vector<16x1xi1> to vector<16x1xi1>
    %75 = vector.broadcast %74 : vector<16x1xi1> to vector<16x4xi1>
    %76 = vector.broadcast %cst_13 : f32 to vector<16x4xf32>
    %77 = arith.select %75, %67, %76 : vector<16x4xi1>, vector<16x4xf32>
    %cst_14 = arith.constant dense<0.000000e+00> : vector<4xf32>
    %78 = vector.multi_reduction <add>, %77, %cst_14 [0] : vector<16x4xf32> to vector<4xf32>
    %79 = vector.shape_cast %78 : vector<4xf32> to vector<1x4xf32>
    %80 = vector.shape_cast %79 : vector<1x4xf32> to vector<1x1x4xf32>
    %c0_15 = arith.constant 0 : index
    %c0_16 = arith.constant 0 : index
    %c0_17 = arith.constant 0 : index
    %81 = vector.load %arg6[%c0_15, %c0_16, %c0_17] : memref<1x1x4xf32, #tpu.memory_space<vmem>>, vector<1x1x4xf32>
    tpu.vector_store %arg6[%c0_15, %c0_16, %c0_17], %80 {strides = array<i32>} : memref<1x1x4xf32, #tpu.memory_space<vmem>>, vector<1x1x4xf32>,
    %cst_18 = arith.constant 0.000000e+00 : f32
    %82 = vector.broadcast %cst_18 : f32 to vector<16x4xf32>
    %83 = arith.cmpf ogt, %77, %82 : vector<16x4xf32>
    %84 = arith.extui %83 : vector<16x4xi1> to vector<16x4xi32>
    %85 = arith.sitofp %84 : vector<16x4xi32> to vector<16x4xf32>
    %cst_19 = arith.constant dense<0.000000e+00> : vector<4xf32>
    %86 = vector.multi_reduction <add>, %85, %cst_19 [0] : vector<16x4xf32> to vector<4xf32>
    %87 = vector.shape_cast %86 : vector<4xf32> to vector<1x4xf32>
    %88 = vector.shape_cast %87 : vector<1x4xf32> to vector<1x1x4xf32>
    %c0_20 = arith.constant 0 : index
    %c0_21 = arith.constant 0 : index
    %c0_22 = arith.constant 0 : index
    %89 = vector.load %arg7[%c0_20, %c0_21, %c0_22] : memref<1x1x4xf32, #tpu.memory_space<vmem>>, vector<1x1x4xf32>
    tpu.vector_store %arg7[%c0_20, %c0_21, %c0_22], %88 {strides = array<i32>} : memref<1x1x4xf32, #tpu.memory_space<vmem>>, vector<1x1x4xf32>,
    %c0_23 = arith.constant 0 : index
    %c0_24 = arith.constant 0 : index
    %90 = vector.load %arg4[%c0_23, %c0_24] : memref<32x128xf32, #tpu.memory_space<vmem>>, vector<32x128xf32>
    %cst_25 = arith.constant dense<0.000000e+00> : vector<16x128xf32>
    %91 = tpu.matmul %0, %90, %cst_25 {dimension_numbers = #tpu.dot_dimension_numbers<[1], [0], [0], [1], [0, 0, 1, 1], [], []>} : vector<16x32xf32>, vector<32x128xf32>, vector<16x128xf32> -> vector<16x128xf32>
    %92 = vector.extract_strided_slice %67 {offsets = [0, 0], sizes = [16, 1], strides = [1, 1]} : vector<16x4xf32> to vector<16x1xf32>
    %93 = vector.extract_strided_slice %91 {offsets = [0, 0], sizes = [16, 32], strides = [1, 1]} : vector<16x128xf32> to vector<16x32xf32>
    %94 = vector.broadcast %92 : vector<16x1xf32> to vector<16x32xf32>
    %95 = arith.mulf %94, %93 : vector<16x32xf32>
    %96 = vector.extract_strided_slice %67 {offsets = [0, 1], sizes = [16, 1], strides = [1, 1]} : vector<16x4xf32> to vector<16x1xf32>
    %97 = vector.extract_strided_slice %91 {offsets = [0, 32], sizes = [16, 32], strides = [1, 1]} : vector<16x128xf32> to vector<16x32xf32>
    %98 = vector.broadcast %96 : vector<16x1xf32> to vector<16x32xf32>
    %99 = arith.mulf %98, %97 : vector<16x32xf32>
    %100 = arith.addf %95, %99 : vector<16x32xf32>
    %101 = vector.extract_strided_slice %67 {offsets = [0, 2], sizes = [16, 1], strides = [1, 1]} : vector<16x4xf32> to vector<16x1xf32>
    %102 = vector.extract_strided_slice %91 {offsets = [0, 64], sizes = [16, 32], strides = [1, 1]} : vector<16x128xf32> to vector<16x32xf32>
    %103 = vector.broadcast %101 : vector<16x1xf32> to vector<16x32xf32>
    %104 = arith.mulf %103, %102 : vector<16x32xf32>
    %105 = arith.addf %100, %104 : vector<16x32xf32>
    %106 = vector.extract_strided_slice %67 {offsets = [0, 3], sizes = [16, 1], strides = [1, 1]} : vector<16x4xf32> to vector<16x1xf32>
    %107 = vector.extract_strided_slice %91 {offsets = [0, 96], sizes = [16, 32], strides = [1, 1]} : vector<16x128xf32> to vector<16x32xf32>
    %108 = vector.broadcast %106 : vector<16x1xf32> to vector<16x32xf32>
    %109 = arith.mulf %108, %107 : vector<16x32xf32>
    %110 = arith.addf %105, %109 : vector<16x32xf32>
    %c0_26 = arith.constant 0 : index
    %c0_27 = arith.constant 0 : index
    %111 = vector.load %arg5[%c0_26, %c0_27] : memref<16x32xf32, #tpu.memory_space<vmem>>, vector<16x32xf32>
    tpu.vector_store %arg5[%c0_26, %c0_27], %110 {strides = array<i32>} : memref<16x32xf32, #tpu.memory_space<vmem>>, vector<16x32xf32>,
    return
  }
  func.func @transform_0(%arg0: i32) -> (i32, i32) {
    %c0_i32 = arith.constant 0 : i32
    %c0_i32_0 = arith.constant 0 : i32
    return %arg0, %c0_i32 : i32, i32
  }
  func.func @transform_1(%arg0: i32) -> (i32, i32) {
    %c0_i32 = arith.constant 0 : i32
    %c0_i32_0 = arith.constant 0 : i32
    %c0_i32_1 = arith.constant 0 : i32
    return %c0_i32, %c0_i32_0 : i32, i32
  }
  func.func @transform_2(%arg0: i32) -> (i32, i32) {
    %c0_i32 = arith.constant 0 : i32
    %c0_i32_0 = arith.constant 0 : i32
    %c0_i32_1 = arith.constant 0 : i32
    return %c0_i32, %c0_i32_0 : i32, i32
  }
  func.func @transform_3(%arg0: i32) -> (i32, i32) {
    %c0_i32 = arith.constant 0 : i32
    %c0_i32_0 = arith.constant 0 : i32
    %c0_i32_1 = arith.constant 0 : i32
    return %c0_i32, %c0_i32_0 : i32, i32
  }
  func.func @transform_4(%arg0: i32) -> (i32, i32) {
    %c0_i32 = arith.constant 0 : i32
    %c0_i32_0 = arith.constant 0 : i32
    return %arg0, %c0_i32 : i32, i32
  }
  func.func @transform_5(%arg0: i32) -> (i32, i32, i32) {
    %c0_i32 = arith.constant 0 : i32
    %c0_i32_0 = arith.constant 0 : i32
    %c0_i32_1 = arith.constant 0 : i32
    return %arg0, %c0_i32, %c0_i32_0 : i32, i32, i32
  }
  func.func @transform_6(%arg0: i32) -> (i32, i32, i32) {
    %c0_i32 = arith.constant 0 : i32
    %c0_i32_0 = arith.constant 0 : i32
    %c0_i32_1 = arith.constant 0 : i32
    return %arg0, %c0_i32, %c0_i32_0 : i32, i32, i32
  }
}

</mosaic_0001>

<llo_original>
// kernel: base_moe_layer_forward.1
$region0: #{base_moe_layer_forward.1}
  #allocation0 [shape = 'u32[]', space=smem, size = 0x4, offset = 0x4, fixed_abs, tag = 'smem constant byte address 0x4 - core index']
  #allocation1 [shape = 'u32[144,128]{1,0:T(1,128)}', space=vmem, size = 0x12000, scoped, tag = 'internal scratch']
  %s0 = inlined_call_operand.hbm [shape: f32[16,32], index: 0, kind: input, shape index: {}]
  %s1 = inlined_call_operand.vmem [shape: f32[32,4], index: 1, kind: input, shape index: {}]
  %s2 = inlined_call_operand.vmem [shape: f32[4,4], index: 2, kind: input, shape index: {}]
  %s3 = inlined_call_operand.vmem [shape: f32[32,128], index: 3, kind: input, shape index: {}]
  %s4 = inlined_call_operand.hbm [shape: f32[16,32], index: 4, kind: output, shape index: {0}]
  %s5 = inlined_call_operand.vmem [shape: f32[1,1,4], index: 5, kind: output, shape index: {1}]
  %s6 = inlined_call_operand.vmem [shape: f32[1,1,4], index: 6, kind: output, shape index: {2}]
  %7 = xla_tuple %s4, %s5, %s6
  %s8 = sld [smem:[#allocation0]]
  $region46: #{base_moe_layer_forward.1} parent=0
    _
  %s10 = ssub.s32 1, %s8
  %s11 = scalar_select 0, %s10, %s8
  $region1: #{base_moe_layer_forward.1} parent=0
    #allocation2 [shape = 'u8[8192]{0}', space=vmem, size = 0x2000, scoped, tag = 'input window, operand 0, single buffered']
    #allocation3 [shape = 's32[1]{0}', space=sflag, size = 0x4, scoped, tag = 'scoped memory for base_moe_layer_forward.1']
    #allocation4 [shape = 's32[1]{0}', space=sflag, size = 0x4, scoped, tag = 'scoped memory for base_moe_layer_forward.1']
    #allocation5 [shape = 'u8[8192]{0}', space=vmem, size = 0x2000, scoped, tag = 'output window, operand 0, single buffered']
    %12 = vsyncpa [#allocation3], 0
    %13 = vsyncpa [#allocation4], 0
    // Predicated region
    $region2: #{base_moe_layer_forward.1} parent=1 // pred_check
      _
    $region3: #{base_moe_layer_forward.1} parent=1 // pred_check_branch
      %15 = sbr.rel (0) target = $region5
    $region4: #{base_moe_layer_forward.1} parent=1 // pred_region
      %s17 = ssub.s32 256, 256
      %18 = vsyncadd [#allocation3], %s17
      %s19 = sshll.u32 [#allocation2], 4
      %s20 = int_to_ptr.vmem [resolvable:$true] %s19
      %25 = dma.hbm_to_vmem [thread:$0]  %s0, 256, %s20, [#allocation3], 128, 128, 8
    $region5: #{base_moe_layer_forward.1} parent=1 // pred_fallthru
      _
    // Predicated region
    $region6: #{base_moe_layer_forward.1} parent=1 // pred_check
      _
    $region7: #{base_moe_layer_forward.1} parent=1 // pred_check_branch
      %27 = sbr.rel (0) target = $region9
    $region8: #{base_moe_layer_forward.1} parent=1 // pred_region
      _
    $region9: #{base_moe_layer_forward.1} parent=1 // pred_fallthru
      _
    // Predicated region
    $region10: #{base_moe_layer_forward.1} parent=1 // pred_check
      _
    $region11: #{base_moe_layer_forward.1} parent=1 // pred_check_branch
      %29 = sbr.rel (0) target = $region13
    $region12: #{base_moe_layer_forward.1} parent=1 // pred_region
      _
    $region13: #{base_moe_layer_forward.1} parent=1 // pred_fallthru
      _
    // Predicated region
    $region14: #{base_moe_layer_forward.1} parent=1 // pred_check
      _
    $region15: #{base_moe_layer_forward.1} parent=1 // pred_check_branch
      %31 = sbr.rel (0) target = $region17
    $region16: #{base_moe_layer_forward.1} parent=1 // pred_region
      _
    $region17: #{base_moe_layer_forward.1} parent=1 // pred_fallthru
      _
    // Predicated region
    $region18: #{base_moe_layer_forward.1} parent=1 // pred_check
      _
    $region19: #{base_moe_layer_forward.1} parent=1 // pred_check_branch
      %33 = sbr.rel (0) target = $region21
    $region20: #{base_moe_layer_forward.1} parent=1 // pred_region
      %34 = dma.done [#allocation3], 256
    $region21: #{base_moe_layer_forward.1} parent=1 // pred_fallthru
      _
    %v35 = vld [vmem:[#allocation2] sm:$0xff]
    %v36 = vld [vmem:[#allocation2 + $0x8] sm:$0xff]
    %v37 = vld [vmem:[%s1] sm:$0xff]
    %v38 = vld [vmem:[%s1 + $0x8] sm:$0xff]
    %v39 = vld [vmem:[%s1 + $0x10] sm:$0xff]
    %v40 = vld [vmem:[%s1 + $0x18] sm:$0xff]
    %vm41 = vcmask 261120
    %v43 = vsel %vm41, %v35, 0
    %v46 = vsel %vm41, %v36, 0
    %48 = vmatprep.subr.mxu0 0.0
    %49 = vmatpush1.msra.mxu0 %v37
    %50 = vmatprep.subr.mxu0 0.0
    %51 = vmatpush1.msra.mxu0 %v38
    %52 = vmatprep.subr.mxu0 0.0
    %53 = vmatpush1.msra.mxu0 %v39
    %54 = vmatprep.subr.mxu0 0.0
    %55 = vmatpush1.msra.mxu0 %v40
    %56 = vmatprep.subr.mxu0 0.0
    %57 = vmatpush1.msra.mxu0 0.0
    %58 = vmatprep.subr.mxu0 0.0
    %59 = vmatpush1.msra.mxu0 0.0
    %60 = vmatprep.subr.mxu0 0.0
    %61 = vmatpush1.msra.mxu0 0.0
    %62 = vmatprep.subr.mxu0 0.0
    %63 = vmatpush1.msra.mxu0 0.0
    %64 = vmatprep.subr.mxu0 0.0
    %65 = vmatpush1.msra.mxu0 0.0
    %66 = vmatprep.subr.mxu0 0.0
    %67 = vmatpush1.msra.mxu0 0.0
    %68 = vmatprep.subr.mxu0 0.0
    %69 = vmatpush1.msra.mxu0 0.0
    %70 = vmatprep.subr.mxu0 0.0
    %71 = vmatpush1.msra.mxu0 0.0
    %72 = vmatprep.subr.mxu0 0.0
    %73 = vmatpush1.msra.mxu0 0.0
    %74 = vmatprep.subr.mxu0 0.0
    %75 = vmatpush1.msra.mxu0 0.0
    %76 = vmatprep.subr.mxu0 0.0
    %77 = vmatpush1.msra.mxu0 0.0
    %78 = vmatprep.subr.mxu0 0.0
    %79 = vmatpush1.msra.mxu0 0.0
    %80 = vmatprep.subr.mxu0 0.0
    %81 = vmatpush1.msra.mxu0 0.0
    %82 = vmatprep.subr.mxu0 0.0
    %83 = vmatpush1.msra.mxu0 0.0
    %84 = vmatprep.subr.mxu0 0.0
    %85 = vmatpush1.msra.mxu0 0.0
    %86 = vmatprep.subr.mxu0 0.0
    %87 = vmatpush1.msra.mxu0 0.0
    %88 = vmatprep.subr.mxu0 0.0
    %89 = vmatpush1.msra.mxu0 0.0
    %90 = vmatprep.subr.mxu0 0.0
    %91 = vmatpush1.msra.mxu0 0.0
    %92 = vmatprep.subr.mxu0 0.0
    %93 = vmatpush1.msra.mxu0 0.0
    %94 = vmatprep.subr.mxu0 0.0
    %95 = vmatpush1.msra.mxu0 0.0
    %96 = vmatprep.subr.mxu0 0.0
    %97 = vmatpush1.msra.mxu0 0.0
    %98 = vmatprep.subr.mxu0 0.0
    %99 = vmatpush1.msra.mxu0 0.0
    %100 = vmatprep.subr.mxu0 0.0
    %101 = vmatpush1.msra.mxu0 0.0
    %102 = vmatprep.subr.mxu0 0.0
    %103 = vmatpush1.msra.mxu0 0.0
    %104 = vmatprep.subr.mxu0 0.0
    %105 = vmatpush1.msra.mxu0 0.0
    %106 = vmatprep.subr.mxu0 0.0
    %107 = vmatpush1.msra.mxu0 0.0
    %108 = vmatprep.subr.mxu0 0.0
    %109 = vmatpush1.msra.mxu0 0.0
    %110 = vmatprep.subr.mxu0 0.0
    %111 = vmatpush1.msra.mxu0 0.0
    %112 = vmatprep.mubr.f32.mxu0 0.0
    %113 = vmatmul.mubr.f32.gmra.mrb[0].mxu0 %v43
    %v114 = vpop.f32.mrb[0].mxu0
    %v115 = vadd.f32 0.0, %v114
    %v116 = vpop.f32.mrb[0].mxu0
    %117 = vmatprep.mubr.f32.mxu0 0.0
    %118 = vmatmul.mubr.f32.gmra.mrb[0].mxu0 %v46
    %v119 = vpop.f32.mrb[0].mxu0
    %v120 = vadd.f32 0.0, %v119
    %v121 = vpop.f32.mrb[0].mxu0
    %122 = vdwg.mxu0
    %v123 = vtanh.pop %v115
    %v124 = vtanh.pop %v120
    %v125 = vld [vmem:[%s2] sm:$0xf]
    %vm126 = vcmask 31744
    %v128 = vsel %vm126, %v123, 0
    %v131 = vsel %vm126, %v124, 0
    %vm133 = vcmask 1043456
    %v135 = vsel %vm133, %v125, 0
    %137 = vmatprep.subr.mxu0 0.0
    %138 = vmatpush1.msra.mxu0 %v135
    %139 = vmatprep.subr.mxu0 0.0
    %140 = vmatpush1.msra.mxu0 0.0
    %141 = vmatprep.subr.mxu0 0.0
    %142 = vmatpush1.msra.mxu0 0.0
    %143 = vmatprep.subr.mxu0 0.0
    %144 = vmatpush1.msra.mxu0 0.0
    %145 = vmatprep.subr.mxu0 0.0
    %146 = vmatpush1.msra.mxu0 0.0
    %147 = vmatprep.subr.mxu0 0.0
    %148 = vmatpush1.msra.mxu0 0.0
    %149 = vmatprep.subr.mxu0 0.0
    %150 = vmatpush1.msra.mxu0 0.0
    %151 = vmatprep.subr.mxu0 0.0
    %152 = vmatpush1.msra.mxu0 0.0
    %153 = vmatprep.subr.mxu0 0.0
    %154 = vmatpush1.msra.mxu0 0.0
    %155 = vmatprep.subr.mxu0 0.0
    %156 = vmatpush1.msra.mxu0 0.0
    %157 = vmatprep.subr.mxu0 0.0
    %158 = vmatpush1.msra.mxu0 0.0
    %159 = vmatprep.subr.mxu0 0.0
    %160 = vmatpush1.msra.mxu0 0.0
    %161 = vmatprep.subr.mxu0 0.0
    %162 = vmatpush1.msra.mxu0 0.0
    %163 = vmatprep.subr.mxu0 0.0
    %164 = vmatpush1.msra.mxu0 0.0
    %165 = vmatprep.subr.mxu0 0.0
    %166 = vmatpush1.msra.mxu0 0.0
    %167 = vmatprep.subr.mxu0 0.0
    %168 = vmatpush1.msra.mxu0 0.0
    %169 = vmatprep.subr.mxu0 0.0
    %170 = vmatpush1.msra.mxu0 0.0
    %171 = vmatprep.subr.mxu0 0.0
    %172 = vmatpush1.msra.mxu0 0.0
    %173 = vmatprep.subr.mxu0 0.0
    %174 = vmatpush1.msra.mxu0 0.0
    %175 = vmatprep.subr.mxu0 0.0
    %176 = vmatpush1.msra.mxu0 0.0
    %177 = vmatprep.subr.mxu0 0.0
    %178 = vmatpush1.msra.mxu0 0.0
    %179 = vmatprep.subr.mxu0 0.0
    %180 = vmatpush1.msra.mxu0 0.0
    %181 = vmatprep.subr.mxu0 0.0
    %182 = vmatpush1.msra.mxu0 0.0
    %183 = vmatprep.subr.mxu0 0.0
    %184 = vmatpush1.msra.mxu0 0.0
    %185 = vmatprep.subr.mxu0 0.0
    %186 = vmatpush1.msra.mxu0 0.0
    %187 = vmatprep.subr.mxu0 0.0
    %188 = vmatpush1.msra.mxu0 0.0
    %189 = vmatprep.subr.mxu0 0.0
    %190 = vmatpush1.msra.mxu0 0.0
    %191 = vmatprep.subr.mxu0 0.0
    %192 = vmatpush1.msra.mxu0 0.0
    %193 = vmatprep.subr.mxu0 0.0
    %194 = vmatpush1.msra.mxu0 0.0
    %195 = vmatprep.subr.mxu0 0.0
    %196 = vmatpush1.msra.mxu0 0.0
    %197 = vmatprep.subr.mxu0 0.0
    %198 = vmatpush1.msra.mxu0 0.0
    %199 = vmatprep.subr.mxu0 0.0
    %200 = vmatpush1.msra.mxu0 0.0
    %201 = vmatprep.mubr.f32.mxu0 0.0
    %202 = vmatmul.mubr.f32.gmra.mrb[0].mxu0 %v128
    %v203 = vpop.f32.mrb[0].mxu0
    %v204 = vadd.f32 0.0, %v203
    %v205 = vpop.f32.mrb[0].mxu0
    %206 = vmatprep.mubr.f32.mxu0 0.0
    %207 = vmatmul.mubr.f32.gmra.mrb[0].mxu0 %v131
    %v208 = vpop.f32.mrb[0].mxu0
    %v209 = vadd.f32 0.0, %v208
    %v210 = vpop.f32.mrb[0].mxu0
    %211 = vdwg.mxu0
    %v212 = vlaneseq
    %v213 = vand.u32 %v212, 127
    %215 = vset.pattern.permute.xlu0 0
    %216 = vperm.xlu0 %215, %v204
    %v217 = vpop.permute.xlu0 %216
    %220 = vset.pattern.permute.xlu0 0
    %221 = vperm.xlu0 %220, %v209
    %v222 = vpop.permute.xlu0 %221
    %vm224 = vcmp.gt.f32.partialorder %v217, %v204
    %vm225 = vcmp.gt.f32.partialorder %v222, %v209
    %vm226 = vcmp.eq.f32.partialorder %v217, %v204
    %vm227 = vcmp.eq.f32.partialorder %v222, %v209
    %vm228 = vcmp.gt.s32.totalorder %v213, 0
    %vm229 = vmand %vm226, %vm228
    %vm230 = vmand %vm227, %vm228
    %vm231 = vmor %vm224, %vm229
    %vm232 = vmor %vm225, %vm230
    %v233 = vsel %vm231, 1, 0
    %v234 = vsel %vm232, 1, 0
    %235 = vset.pattern.permute.xlu0 1
    %236 = vperm.xlu0 %235, %v204
    %v237 = vpop.permute.xlu0 %236
    %239 = vset.pattern.permute.xlu0 1
    %240 = vperm.xlu0 %239, %v209
    %v241 = vpop.permute.xlu0 %240
    %vm243 = vcmp.gt.f32.partialorder %v237, %v204
    %vm244 = vcmp.gt.f32.partialorder %v241, %v209
    %vm245 = vcmp.eq.f32.partialorder %v237, %v204
    %vm246 = vcmp.eq.f32.partialorder %v241, %v209
    %vm247 = vcmp.gt.s32.totalorder %v213, 1
    %vm248 = vmand %vm245, %vm247
    %vm249 = vmand %vm246, %vm247
    %vm250 = vmor %vm243, %vm248
    %vm251 = vmor %vm244, %vm249
    %v252 = vsel %vm250, 1, 0
    %v253 = vsel %vm251, 1, 0
    %v254 = vadd.s32 %v233, %v252
    %v255 = vadd.s32 %v234, %v253
    %256 = vset.pattern.permute.xlu0 2
    %257 = vperm.xlu0 %256, %v204
    %v258 = vpop.permute.xlu0 %257
    %260 = vset.pattern.permute.xlu0 2
    %261 = vperm.xlu0 %260, %v209
    %v262 = vpop.permute.xlu0 %261
    %vm264 = vcmp.gt.f32.partialorder %v258, %v204
    %vm265 = vcmp.gt.f32.partialorder %v262, %v209
    %vm266 = vcmp.eq.f32.partialorder %v258, %v204
    %vm267 = vcmp.eq.f32.partialorder %v262, %v209
    %vm268 = vcmp.gt.s32.totalorder %v213, 2
    %vm269 = vmand %vm266, %vm268
    %vm270 = vmand %vm267, %vm268
    %vm271 = vmor %vm264, %vm269
    %vm272 = vmor %vm265, %vm270
    %v273 = vsel %vm271, 1, 0
    %v274 = vsel %vm272, 1, 0
    %v275 = vadd.s32 %v254, %v273
    %v276 = vadd.s32 %v255, %v274
    %277 = vset.pattern.permute.xlu0 3
    %278 = vperm.xlu0 %277, %v204
    %v279 = vpop.permute.xlu0 %278
    %281 = vset.pattern.permute.xlu0 3
    %282 = vperm.xlu0 %281, %v209
    %v283 = vpop.permute.xlu0 %282
    %vm285 = vcmp.gt.f32.partialorder %v279, %v204
    %vm286 = vcmp.gt.f32.partialorder %v283, %v209
    %vm287 = vcmp.eq.f32.partialorder %v279, %v204
    %vm288 = vcmp.eq.f32.partialorder %v283, %v209
    %vm289 = vcmp.gt.s32.totalorder %v213, 3
    %vm290 = vmand %vm287, %vm289
    %vm291 = vmand %vm288, %vm289
    %vm292 = vmor %vm285, %vm290
    %vm293 = vmor %vm286, %vm291
    %v294 = vsel %vm292, 1, 0
    %v295 = vsel %vm293, 1, 0
    %v296 = vadd.s32 %v275, %v294
    %v297 = vadd.s32 %v276, %v295
    %vm298 = vcmp.lt.s32.totalorder %v296, 2
    %vm299 = vcmp.lt.s32.totalorder %v297, 2
    %v300 = vsel %vm298, %v204, -1e+30
    %v301 = vsel %vm299, %v209, -1e+30
    %v302 = vsel %vm126, %v300, -inf
    %303 = vmax.xlane.f32.xlu0 %v302
    %v304 = vpop.xlane.xlu0 %303
    %v305 = vsel %vm126, %v301, -inf
    %306 = vmax.xlane.f32.xlu0 %v305
    %v307 = vpop.xlane.xlu0 %306
    %v308 = vsub.f32 %v300, %v304
    %v309 = vsub.f32 %v301, %v307
    %v310 = vmul.f32 %v308, 1.442695
    %v311 = vpow.pop %v310
    %v312 = vmul.f32 %v309, 1.442695
    %v313 = vpow.pop %v312
    %v314 = vsel %vm298, %v311, 0.0
    %v315 = vsel %vm299, %v313, 0.0
    %v316 = vsel %vm126, %v314, 0.0
    %317 = vadd.xlane.f32.xlu0 %v316
    %v318 = vpop.xlane.xlu0 %317
    %v319 = vsel %vm126, %v315, 0.0
    %320 = vadd.xlane.f32.xlu0 %v319
    %v321 = vpop.xlane.xlu0 %320
    %v322 = vrcp.pop %v318
    %v323 = vrcp.pop %v321
    %v324 = vmul.f32 %v314, %v322
    %v325 = vmul.f32 %v315, %v323
    %v326 = vlaneseq
    %v327 = vshrl.u32 %v326, 7
    %v328 = vadd.s32 %v327, 8
    %s329 = smul.u32 0, 16
    %v330 = vstv %s329
    %v331 = vadd.s32 %v330, %v327
    %v332 = vadd.s32 %v330, %v328
    %vm333 = vcmp.lt.s32.totalorder %v331, 16
    %vm334 = vcmp.lt.s32.totalorder %v332, 16
    %v335 = vsel %vm333, 1, 0
    %v336 = vsel %vm334, 1, 0
    %vm337 = vcmp.eq.s32.totalorder %v335, 1
    %vm338 = vcmp.eq.s32.totalorder %v336, 1
    %v339 = vsel %vm337, %v324, 0.0
    %v340 = vsel %vm338, %v325, 0.0
    %v341 = vsel %vm126, %v339, 0.0
    %v342 = vsel %vm126, %v340, 0.0
    %v343 = vadd.f32 %v341, %v342
    %v344 = vrot.slane %v343, 4
    %v345 = vadd.f32 %v343, %v344
    %v346 = vrot.slane %v345, 2
    %v347 = vadd.f32 %v345, %v346
    %v348 = vrot.slane %v347, 1
    %v349 = vadd.f32 %v347, %v348
    %vm350 = vcmask 24576
    %351 = vst.msk [vmem:[%s5] sm:$0x1] %vm350, %v349
    %vm352 = vcmp.gt.f32.partialorder %v339, 0.0
    %vm353 = vcmp.gt.f32.partialorder %v340, 0.0
    %v354 = vsel %vm352, 1, 0
    %v355 = vsel %vm353, 1, 0
    %v356 = vcvt.s32.f32 %v354
    %v357 = vcvt.s32.f32 %v355
    %v358 = vsel %vm126, %v356, 0.0
    %v359 = vsel %vm126, %v357, 0.0
    %v360 = vadd.f32 %v358, %v359
    %v361 = vrot.slane %v360, 4
    %v362 = vadd.f32 %v360, %v361
    %v363 = vrot.slane %v362, 2
    %v364 = vadd.f32 %v362, %v363
    %v365 = vrot.slane %v364, 1
    %v366 = vadd.f32 %v364, %v365
    %367 = vst.msk [vmem:[%s6] sm:$0x1] %vm350, %v366
    %v368 = vld [vmem:[%s3] sm:$0xff]
    %v369 = vld [vmem:[%s3 + $0x8] sm:$0xff]
    %v370 = vld [vmem:[%s3 + $0x10] sm:$0xff]
    %v371 = vld [vmem:[%s3 + $0x18] sm:$0xff]
    %372 = vmatprep.subr.mxu0 0.0
    %373 = vmatpush1.msra.mxu0 %v368
    %374 = vmatprep.subr.mxu0 0.0
    %375 = vmatpush1.msra.mxu0 %v369
    %376 = vmatprep.subr.mxu0 0.0
    %377 = vmatpush1.msra.mxu0 %v370
    %378 = vmatprep.subr.mxu0 0.0
    %379 = vmatpush1.msra.mxu0 %v371
    %380 = vmatprep.subr.mxu0 0.0
    %381 = vmatpush1.msra.mxu0 0.0
    %382 = vmatprep.subr.mxu0 0.0
    %383 = vmatpush1.msra.mxu0 0.0
    %384 = vmatprep.subr.mxu0 0.0
    %385 = vmatpush1.msra.mxu0 0.0
    %386 = vmatprep.subr.mxu0 0.0
    %387 = vmatpush1.msra.mxu0 0.0
    %388 = vmatprep.subr.mxu0 0.0
    %389 = vmatpush1.msra.mxu0 0.0
    %390 = vmatprep.subr.mxu0 0.0
    %391 = vmatpush1.msra.mxu0 0.0
    %392 = vmatprep.subr.mxu0 0.0
    %393 = vmatpush1.msra.mxu0 0.0
    %394 = vmatprep.subr.mxu0 0.0
    %395 = vmatpush1.msra.mxu0 0.0
    %396 = vmatprep.subr.mxu0 0.0
    %397 = vmatpush1.msra.mxu0 0.0
    %398 = vmatprep.subr.mxu0 0.0
    %399 = vmatpush1.msra.mxu0 0.0
    %400 = vmatprep.subr.mxu0 0.0
    %401 = vmatpush1.msra.mxu0 0.0
    %402 = vmatprep.subr.mxu0 0.0
    %403 = vmatpush1.msra.mxu0 0.0
    %404 = vmatprep.subr.mxu0 0.0
    %405 = vmatpush1.msra.mxu0 0.0
    %406 = vmatprep.subr.mxu0 0.0
    %407 = vmatpush1.msra.mxu0 0.0
    %408 = vmatprep.subr.mxu0 0.0
    %409 = vmatpush1.msra.mxu0 0.0
    %410 = vmatprep.subr.mxu0 0.0
    %411 = vmatpush1.msra.mxu0 0.0
    %412 = vmatprep.subr.mxu0 0.0
    %413 = vmatpush1.msra.mxu0 0.0
    %414 = vmatprep.subr.mxu0 0.0
    %415 = vmatpush1.msra.mxu0 0.0
    %416 = vmatprep.subr.mxu0 0.0
    %417 = vmatpush1.msra.mxu0 0.0
    %418 = vmatprep.subr.mxu0 0.0
    %419 = vmatpush1.msra.mxu0 0.0
    %420 = vmatprep.subr.mxu0 0.0
    %421 = vmatpush1.msra.mxu0 0.0
    %422 = vmatprep.subr.mxu0 0.0
    %423 = vmatpush1.msra.mxu0 0.0
    %424 = vmatprep.subr.mxu0 0.0
    %425 = vmatpush1.msra.mxu0 0.0
    %426 = vmatprep.subr.mxu0 0.0
    %427 = vmatpush1.msra.mxu0 0.0
    %428 = vmatprep.subr.mxu0 0.0
    %429 = vmatpush1.msra.mxu0 0.0
    %430 = vmatprep.subr.mxu0 0.0
    %431 = vmatpush1.msra.mxu0 0.0
    %432 = vmatprep.subr.mxu0 0.0
    %433 = vmatpush1.msra.mxu0 0.0
    %434 = vmatprep.subr.mxu0 0.0
    %435 = vmatpush1.msra.mxu0 0.0
    %436 = vmatprep.mubr.f32.mxu0 0.0
    %437 = vmatmul.mubr.f32.gmra.mrb[0].mxu0 %v43
    %v438 = vpop.f32.mrb[0].mxu0
    %v439 = vadd.f32 0.0, %v438
    %v440 = vpop.f32.mrb[0].mxu0
    %441 = vmatprep.mubr.f32.mxu0 0.0
    %442 = vmatmul.mubr.f32.gmra.mrb[0].mxu0 %v46
    %v443 = vpop.f32.mrb[0].mxu0
    %v444 = vadd.f32 0.0, %v443
    %v445 = vpop.f32.mrb[0].mxu0
    %446 = vdwg.mxu0
    %448 = vset.pattern.permute.xlu0 0
    %449 = vperm.xlu0 %448, %v324
    %v450 = vpop.permute.xlu0 %449
    %453 = vset.pattern.permute.xlu0 0
    %454 = vperm.xlu0 %453, %v325
    %v455 = vpop.permute.xlu0 %454
    %v457 = vmul.f32 %v450, %v439
    %v458 = vmul.f32 %v455, %v444
    %459 = vset.pattern.permute.xlu0 1
    %460 = vperm.xlu0 %459, %v324
    %v461 = vpop.permute.xlu0 %460
    %463 = vset.pattern.permute.xlu0 1
    %464 = vperm.xlu0 %463, %v325
    %v465 = vpop.permute.xlu0 %464
    %v467 = vmul.f32 %v461, %v439
    %v468 = vmul.f32 %v465, %v444
    %471 = vrot.lane.b32.xlu0 %v467, 96
    %v472 = vpop.permute.xlu0 %471
    %473 = vrot.lane.b32.xlu0 %v468, 96
    %v474 = vpop.permute.xlu0 %473
    %v477 = vadd.f32 %v457, %v472
    %v478 = vadd.f32 %v458, %v474
    %479 = vset.pattern.permute.xlu0 2
    %480 = vperm.xlu0 %479, %v324
    %v481 = vpop.permute.xlu0 %480
    %483 = vset.pattern.permute.xlu0 2
    %484 = vperm.xlu0 %483, %v325
    %v485 = vpop.permute.xlu0 %484
    %v487 = vmul.f32 %v481, %v439
    %v488 = vmul.f32 %v485, %v444
    %491 = vrot.lane.b32.xlu0 %v487, 64
    %v492 = vpop.permute.xlu0 %491
    %493 = vrot.lane.b32.xlu0 %v488, 64
    %v494 = vpop.permute.xlu0 %493
    %v497 = vadd.f32 %v477, %v492
    %v498 = vadd.f32 %v478, %v494
    %499 = vset.pattern.permute.xlu0 3
    %500 = vperm.xlu0 %499, %v324
    %v501 = vpop.permute.xlu0 %500
    %503 = vset.pattern.permute.xlu0 3
    %504 = vperm.xlu0 %503, %v325
    %v505 = vpop.permute.xlu0 %504
    %v507 = vmul.f32 %v501, %v439
    %v508 = vmul.f32 %v505, %v444
    %511 = vrot.lane.b32.xlu0 %v507, 32
    %v512 = vpop.permute.xlu0 %511
    %513 = vrot.lane.b32.xlu0 %v508, 32
    %v514 = vpop.permute.xlu0 %513
    %v517 = vadd.f32 %v497, %v512
    %v518 = vadd.f32 %v498, %v514
    %519 = vst.msk [vmem:[#allocation5] sm:$0xff] %vm41, %v517
    %520 = vst.msk [vmem:[#allocation5 + $0x8] sm:$0xff] %vm41, %v518
    // Predicated region
    $region22: #{base_moe_layer_forward.1} parent=1 // pred_check
      _
    $region23: #{base_moe_layer_forward.1} parent=1 // pred_check_branch
      %522 = sbr.rel (0) target = $region25
    $region24: #{base_moe_layer_forward.1} parent=1 // pred_region
      %s524 = ssub.s32 256, 256
      %525 = vsyncadd [#allocation4], %s524
      %s526 = sshll.u32 [#allocation5], 4
      %s527 = int_to_ptr.vmem [resolvable:$true] %s526
      %532 = dma.vmem_to_hbm [thread:$0]  %s527, 256, %s4, [#allocation4], 128, 128, 8
    $region25: #{base_moe_layer_forward.1} parent=1 // pred_fallthru
      _
    // Predicated region
    $region26: #{base_moe_layer_forward.1} parent=1 // pred_check
      _
    $region27: #{base_moe_layer_forward.1} parent=1 // pred_check_branch
      %534 = sbr.rel (0) target = $region29
    $region28: #{base_moe_layer_forward.1} parent=1 // pred_region
      _
    $region29: #{base_moe_layer_forward.1} parent=1 // pred_fallthru
      _
    // Predicated region
    $region30: #{base_moe_layer_forward.1} parent=1 // pred_check
      _
    $region31: #{base_moe_layer_forward.1} parent=1 // pred_check_branch
      %536 = sbr.rel (0) target = $region33
    $region32: #{base_moe_layer_forward.1} parent=1 // pred_region
      _
    $region33: #{base_moe_layer_forward.1} parent=1 // pred_fallthru
      _
    // Predicated region
    $region34: #{base_moe_layer_forward.1} parent=1 // pred_check
      _
    $region35: #{base_moe_layer_forward.1} parent=1 // pred_check_branch
      %538 = sbr.rel (0) target = $region37
    $region36: #{base_moe_layer_forward.1} parent=1 // pred_region
      %539 = dma.done [#allocation4], 256
    $region37: #{base_moe_layer_forward.1} parent=1 // pred_fallthru
      _
    // Predicated region
    $region38: #{base_moe_layer_forward.1} parent=1 // pred_check
      _
    $region39: #{base_moe_layer_forward.1} parent=1 // pred_check_branch
      %541 = sbr.rel (0) target = $region41
    $region40: #{base_moe_layer_forward.1} parent=1 // pred_region
      _
    $region41: #{base_moe_layer_forward.1} parent=1 // pred_fallthru
      _
    // Predicated region
    $region42: #{base_moe_layer_forward.1} parent=1 // pred_check
      _
    $region43: #{base_moe_layer_forward.1} parent=1 // pred_check_branch
      %543 = sbr.rel (0) target = $region45
    $region44: #{base_moe_layer_forward.1} parent=1 // pred_region
      _
    $region45: #{base_moe_layer_forward.1} parent=1 // pred_fallthru
      _
    %544 = vsyncpa [#allocation3], 1
    %545 = vsyncpa [#allocation4], 1

</llo_original>
